<compile_context>
chip_gen: v6e
topology: v6e:2x2x1
jax: 0.10.0
libtpu: 0.0.40
codegen_flags: <defaults>
</compile_context>

<pallas_src>
import functools

import jax
import jax.numpy as jnp
from jax.experimental import pallas as pl
from jax.experimental.pallas import tpu as pltpu

BN_EPS = 1e-5


def _round_up(x, m):
    return ((x + m - 1) // m) * m


def _matmul_stats_kernel(p_ref, w_ref, y_ref, sum_ref, sumsq_ref):
    """Phase 1: Y tile = P tile @ W (f32 acc); accumulate per-channel moments."""
    @pl.when(pl.program_id(0) == 0)
    def _():
        sum_ref[...] = jnp.zeros_like(sum_ref)
        sumsq_ref[...] = jnp.zeros_like(sumsq_ref)

    y = jnp.dot(p_ref[...], w_ref[...], preferred_element_type=jnp.float32)
    y_ref[...] = y.astype(y_ref.dtype)
    sum_ref[...] += jnp.sum(y, axis=0, keepdims=True)
    sumsq_ref[...] += jnp.sum(y * y, axis=0, keepdims=True)


def _normalize_relu_kernel(y_ref, scale_ref, shift_ref, o_ref):
    """Phase 2: folded BatchNorm (y*scale + shift) + ReLU on one M tile."""
    y = y_ref[...].astype(jnp.float32)
    o_ref[...] = jnp.maximum(y * scale_ref[...] + shift_ref[...], 0.0).astype(o_ref.dtype)


def _im2col_nhwc(x_nchw, kernel_size, stride, padding, k_pad):
    """Build patches [N*OH*OW, K_pad] directly in (M, K) layout (no post-expansion transpose)."""
    n, c, h, w = x_nchw.shape
    kh = kw = kernel_size
    oh = (h + 2 * padding - kh) // stride + 1
    ow = (w + 2 * padding - kw) // stride + 1
    # One small NHWC transpose of the input (done BEFORE the kh*kw duplication).
    x = jnp.transpose(x_nchw, (0, 2, 3, 1))
    x = jnp.pad(x, ((0, 0), (padding, padding), (padding, padding), (0, 0)))
    cols = []
    for ki in range(kh):
        for kj in range(kw):
            cols.append(x[:, ki:ki + stride * oh:stride, kj:kj + stride * ow:stride, :])
    # (N, OH, OW, C, kh*kw): K index order = c*(kh*kw) + ki*kw + kj, matching
    # conv_w.reshape(oc, c*kh*kw).
    patches = jnp.stack(cols, axis=-1)
    patches = patches.reshape(n * oh * ow, c * kh * kw)
    k = c * kh * kw
    if k_pad > k:
        patches = jnp.pad(patches, ((0, 0), (0, k_pad - k)))
    return patches, (n, oh, ow)


@functools.partial(jax.jit,
                   static_argnames=("kernel_size", "stride", "padding", "tm", "compute_dtype"))
def conv_block_forward(x, conv_w, conv_b, bn_gamma, bn_beta, *,
                       kernel_size, stride, padding, tm=256, compute_dtype=jnp.bfloat16):
    """Matches ConvBlock.forward (train-mode BN) on NCHW input x; returns NCHW output."""
    del conv_b  # Train-mode BatchNorm's per-channel mean subtraction cancels the conv bias.
    oc, ic, kh, kw = conv_w.shape
    k = ic * kh * kw
    k_pad = _round_up(k, 8)          # sublane alignment for W; keep P's HBM bytes low
    oc_pad = _round_up(oc, 128)      # lane-dense MXU output & unmasked stores

    patches, (n, oh, ow) = _im2col_nhwc(
        x.astype(jnp.float32), kernel_size, stride, padding, k_pad)
    m = n * oh * ow

    tm_eff = min(tm, _round_up(m, 8))
    m_pad = _round_up(m, tm_eff)
    if m_pad > m:
        patches = jnp.pad(patches, ((0, m_pad - m), (0, 0)))
    patches = patches.astype(compute_dtype)

    w_mat = conv_w.reshape(oc, k).T.astype(jnp.float32)                    # (K, OC)
    w_mat = jnp.pad(w_mat, ((0, k_pad - k), (0, oc_pad - oc))).astype(compute_dtype)
    gamma = jnp.pad(bn_gamma.astype(jnp.float32), (0, oc_pad - oc)).reshape(1, oc_pad)
    beta = jnp.pad(bn_beta.astype(jnp.float32), (0, oc_pad - oc)).reshape(1, oc_pad)

    grid = (m_pad // tm_eff,)
    vmem_limit = 32 * 1024 * 1024  # fits v7x's 64 MiB physical VMEM with headroom
    cp_stats = pltpu.CompilerParams(dimension_semantics=("arbitrary",),
                                    vmem_limit_bytes=vmem_limit)
    cp_norm = pltpu.CompilerParams(dimension_semantics=("parallel",),
                                   vmem_limit_bytes=vmem_limit)

    # Phase 1: tiled matmul + per-channel sum / sum-of-squares accumulation.
    y, ch_sum, ch_sumsq = pl.pallas_call(
        _matmul_stats_kernel,
        out_shape=(jax.ShapeDtypeStruct((m_pad, oc_pad), compute_dtype),
                   jax.ShapeDtypeStruct((1, oc_pad), jnp.float32),
                   jax.ShapeDtypeStruct((1, oc_pad), jnp.float32)),
        grid=grid,
        in_specs=[pl.BlockSpec((tm_eff, k_pad), lambda i: (i, 0)),
                  pl.BlockSpec((k_pad, oc_pad), lambda i: (0, 0))],
        out_specs=(pl.BlockSpec((tm_eff, oc_pad), lambda i: (i, 0)),
                   pl.BlockSpec((1, oc_pad), lambda i: (0, 0)),
                   pl.BlockSpec((1, oc_pad), lambda i: (0, 0))),
        compiler_params=cp_stats,
    )(patches, w_mat)

    # Fold BN stats + affine into one per-channel scale/shift (tiny; f32 to avoid cancellation).
    mean = ch_sum / m                       # divide by the true M; padded rows contribute zero
    var = ch_sumsq / m - mean * mean
    scale = gamma * jax.lax.rsqrt(var + BN_EPS)
    shift = beta - mean * scale

    # Phase 2: normalize + ReLU, tiled over M, parallel across TensorCores.
    out_flat = pl.pallas_call(
        _normalize_relu_kernel,
        out_shape=jax.ShapeDtypeStruct((m_pad, oc_pad), jnp.float32),
        grid=grid,
        in_specs=[pl.BlockSpec((tm_eff, oc_pad), lambda i: (i, 0)),
                  pl.BlockSpec((1, oc_pad), lambda i: (0, 0)),
                  pl.BlockSpec((1, oc_pad), lambda i: (0, 0))],
        out_specs=pl.BlockSpec((tm_eff, oc_pad), lambda i: (i, 0)),
        compiler_params=cp_norm,
    )(y, scale, shift)

    out = out_flat[:m, :oc].reshape(n, oh, ow, oc)
    # NCHW for parity with the PyTorch module (NHWC end-to-end would avoid this pass).
    return jnp.transpose(out, (0, 3, 1, 2))


def _reference(x, conv_w, conv_b, bn_gamma, bn_beta, stride, padding):
    """Pure-JAX f32 reference of ConvBlock.forward (train-mode BN)."""
    y = jax.lax.conv_general_dilated(
        x.astype(jnp.float32), conv_w.astype(jnp.float32),
        window_strides=(stride, stride),
        padding=[(padding, padding), (padding, padding)],
        dimension_numbers=("NCHW", "OIHW", "NCHW"),
    ) + conv_b.reshape(1, -1, 1, 1)
    mean = jnp.mean(y, axis=(0, 2, 3), keepdims=True)
    var = jnp.mean((y - mean) ** 2, axis=(0, 2, 3), keepdims=True)
    y = (y - mean) * jax.lax.rsqrt(var + BN_EPS)
    y = y * bn_gamma.reshape(1, -1, 1, 1) + bn_beta.reshape(1, -1, 1, 1)
    return jnp.maximum(y, 0.0)


if __name__ == "__main__":
    # ConvBlock(in_channels=4, out_channels=8, kernel_size=3, stride=1, padding=1)
    N, C_IN, H, W = 2, 4, 16, 16
    C_OUT, KSIZE, STRIDE, PAD = 8, 3, 1, 1

    key = jax.random.PRNGKey(0)
    k_x, k_w, k_b, k_g, k_beta = jax.random.split(key, 5)

    x = jax.random.normal(k_x, (N, C_IN, H, W), dtype=jnp.float32)
    conv_w = jax.random.normal(k_w, (C_OUT, C_IN, KSIZE, KSIZE), dtype=jnp.float32) * 0.1
    conv_b = jax.random.normal(k_b, (C_OUT,), dtype=jnp.float32) * 0.1
    bn_gamma = 1.0 + 0.1 * jax.random.normal(k_g, (C_OUT,), dtype=jnp.float32)
    bn_beta = 0.1 * jax.random.normal(k_beta, (C_OUT,), dtype=jnp.float32)

    out = conv_block_forward(x, conv_w, conv_b, bn_gamma, bn_beta,
                             kernel_size=KSIZE, stride=STRIDE, padding=PAD)
    out = jax.block_until_ready(out)

    ref = _reference(x, conv_w, conv_b, bn_gamma, bn_beta, STRIDE, PAD)
    assert out.shape == (N, C_OUT, H, W), out.shape
    # bf16 operands (f32 accumulation) -> relaxed tolerance vs the f32 reference.
    max_err = float(jnp.max(jnp.abs(out - ref)))
    assert max_err < 5e-2, f"max abs err {max_err}"

    print("KERNEL_OK")
</pallas_src>

<mosaic_0001>
module attributes {stable_mosaic.version = 11 : i64} {
  func.func @_matmul_stats_kernel(%arg0: i32, %arg1: memref<256x40xbf16, #tpu.memory_space<vmem>>, %arg2: memref<40x128xbf16, #tpu.memory_space<vmem>>, %arg3: memref<256x128xbf16, #tpu.memory_space<vmem>>, %arg4: memref<1x128xf32, #tpu.memory_space<vmem>>, %arg5: memref<1x128xf32, #tpu.memory_space<vmem>>) attributes {dimension_semantics = [#tpu.dimension_semantics<arbitrary>], iteration_bounds = array<i64: 2>, scalar_prefetch = 0 : i64, scratch_operands = 0 : i64, tpu.core_type = #tpu.core_type<tc>, window_params = [{transform_indices = @transform_0, window_bounds = array<i64: 256, 40>}, {pipeline_mode = #tpu.pipeline_mode<synchronous>, transform_indices = @transform_1, window_bounds = array<i64: 40, 128>}, {transform_indices = @transform_2, window_bounds = array<i64: 256, 128>}, {pipeline_mode = #tpu.pipeline_mode<synchronous>, transform_indices = @transform_3, window_bounds = array<i64: 1, 128>}, {pipeline_mode = #tpu.pipeline_mode<synchronous>, transform_indices = @transform_4, window_bounds = array<i64: 1, 128>}]} {
    %c0_i32 = arith.constant 0 : i32
    %0 = arith.cmpi eq, %arg0, %c0_i32 : i32
    %1 = arith.extui %0 : i1 to i32
    %c0_i32_0 = arith.constant 0 : i32
    %2 = arith.cmpi ne, %1, %c0_i32_0 : i32
    scf.if %2 {
      %cst_16 = arith.constant 0.000000e+00 : f32
      %19 = vector.broadcast %cst_16 : f32 to vector<1x128xf32>
      %c0_17 = arith.constant 0 : index
      %c0_18 = arith.constant 0 : index
      %20 = vector.load %arg4[%c0_17, %c0_18] : memref<1x128xf32, #tpu.memory_space<vmem>>, vector<1x128xf32>
      tpu.vector_store %arg4[%c0_17, %c0_18], %19 {strides = array<i32>} : memref<1x128xf32, #tpu.memory_space<vmem>>, vector<1x128xf32>,
      %cst_19 = arith.constant 0.000000e+00 : f32
      %21 = vector.broadcast %cst_19 : f32 to vector<1x128xf32>
      %c0_20 = arith.constant 0 : index
      %c0_21 = arith.constant 0 : index
      %22 = vector.load %arg5[%c0_20, %c0_21] : memref<1x128xf32, #tpu.memory_space<vmem>>, vector<1x128xf32>
      tpu.vector_store %arg5[%c0_20, %c0_21], %21 {strides = array<i32>} : memref<1x128xf32, #tpu.memory_space<vmem>>, vector<1x128xf32>,
    } else {
    }
    %c0 = arith.constant 0 : index
    %c0_1 = arith.constant 0 : index
    %3 = vector.load %arg1[%c0, %c0_1] : memref<256x40xbf16, #tpu.memory_space<vmem>>, vector<256x40xbf16>
    %c0_2 = arith.constant 0 : index
    %c0_3 = arith.constant 0 : index
    %4 = vector.load %arg2[%c0_2, %c0_3] : memref<40x128xbf16, #tpu.memory_space<vmem>>, vector<40x128xbf16>
    %cst = arith.constant dense<0.000000e+00> : vector<256x128xf32>
    %5 = tpu.matmul %3, %4, %cst {dimension_numbers = #tpu.dot_dimension_numbers<[1], [0], [0], [1], [0, 0, 1, 1], [], []>} : vector<256x40xbf16>, vector<40x128xbf16>, vector<256x128xf32> -> vector<256x128xf32>
    %6 = arith.truncf %5 : vector<256x128xf32> to vector<256x128xbf16>
    %c0_4 = arith.constant 0 : index
    %c0_5 = arith.constant 0 : index
    %7 = vector.load %arg3[%c0_4, %c0_5] : memref<256x128xbf16, #tpu.memory_space<vmem>>, vector<256x128xbf16>
    tpu.vector_store %arg3[%c0_4, %c0_5], %6 {strides = array<i32>} : memref<256x128xbf16, #tpu.memory_space<vmem>>, vector<256x128xbf16>,
    %c0_6 = arith.constant 0 : index
    %c0_7 = arith.constant 0 : index
    %8 = vector.load %arg4[%c0_6, %c0_7] : memref<1x128xf32, #tpu.memory_space<vmem>>, vector<1x128xf32>
    %cst_8 = arith.constant dense<0.000000e+00> : vector<128xf32>
    %9 = vector.multi_reduction <add>, %5, %cst_8 [0] : vector<256x128xf32> to vector<128xf32>
    %10 = vector.shape_cast %9 : vector<128xf32> to vector<1x128xf32>
    %11 = arith.addf %8, %10 : vector<1x128xf32>
    %c0_9 = arith.constant 0 : index
    %c0_10 = arith.constant 0 : index
    %12 = vector.load %arg4[%c0_9, %c0_10] : memref<1x128xf32, #tpu.memory_space<vmem>>, vector<1x128xf32>
    tpu.vector_store %arg4[%c0_9, %c0_10], %11 {strides = array<i32>} : memref<1x128xf32, #tpu.memory_space<vmem>>, vector<1x128xf32>,
    %c0_11 = arith.constant 0 : index
    %c0_12 = arith.constant 0 : index
    %13 = vector.load %arg5[%c0_11, %c0_12] : memref<1x128xf32, #tpu.memory_space<vmem>>, vector<1x128xf32>
    %14 = arith.mulf %5, %5 : vector<256x128xf32>
    %cst_13 = arith.constant dense<0.000000e+00> : vector<128xf32>
    %15 = vector.multi_reduction <add>, %14, %cst_13 [0] : vector<256x128xf32> to vector<128xf32>
    %16 = vector.shape_cast %15 : vector<128xf32> to vector<1x128xf32>
    %17 = arith.addf %13, %16 : vector<1x128xf32>
    %c0_14 = arith.constant 0 : index
    %c0_15 = arith.constant 0 : index
    %18 = vector.load %arg5[%c0_14, %c0_15] : memref<1x128xf32, #tpu.memory_space<vmem>>, vector<1x128xf32>
    tpu.vector_store %arg5[%c0_14, %c0_15], %17 {strides = array<i32>} : memref<1x128xf32, #tpu.memory_space<vmem>>, vector<1x128xf32>,
    return
  }
  func.func @transform_0(%arg0: i32) -> (i32, i32) {
    %c0_i32 = arith.constant 0 : i32
    %c0_i32_0 = arith.constant 0 : i32
    return %arg0, %c0_i32 : i32, i32
  }
  func.func @transform_1(%arg0: i32) -> (i32, i32) {
    %c0_i32 = arith.constant 0 : i32
    %c0_i32_0 = arith.constant 0 : i32
    %c0_i32_1 = arith.constant 0 : i32
    return %c0_i32, %c0_i32_0 : i32, i32
  }
  func.func @transform_2(%arg0: i32) -> (i32, i32) {
    %c0_i32 = arith.constant 0 : i32
    %c0_i32_0 = arith.constant 0 : i32
    return %arg0, %c0_i32 : i32, i32
  }
  func.func @transform_3(%arg0: i32) -> (i32, i32) {
    %c0_i32 = arith.constant 0 : i32
    %c0_i32_0 = arith.constant 0 : i32
    %c0_i32_1 = arith.constant 0 : i32
    return %c0_i32, %c0_i32_0 : i32, i32
  }
  func.func @transform_4(%arg0: i32) -> (i32, i32) {
    %c0_i32 = arith.constant 0 : i32
    %c0_i32_0 = arith.constant 0 : i32
    %c0_i32_1 = arith.constant 0 : i32
    return %c0_i32, %c0_i32_0 : i32, i32
  }
}

module attributes {stable_mosaic.version = 11 : i64} {
  func.func @_normalize_relu_kernel(%arg0: i32, %arg1: memref<256x128xbf16, #tpu.memory_space<vmem>>, %arg2: memref<1x128xf32, #tpu.memory_space<vmem>>, %arg3: memref<1x128xf32, #tpu.memory_space<vmem>>, %arg4: memref<256x128xf32, #tpu.memory_space<vmem>>) attributes {dimension_semantics = [#tpu.dimension_semantics<parallel>], iteration_bounds = array<i64: 2>, scalar_prefetch = 0 : i64, scratch_operands = 0 : i64, tpu.core_type = #tpu.core_type<tc>, window_params = [{transform_indices = @transform_0, window_bounds = array<i64: 256, 128>}, {pipeline_mode = #tpu.pipeline_mode<synchronous>, transform_indices = @transform_1, window_bounds = array<i64: 1, 128>}, {pipeline_mode = #tpu.pipeline_mode<synchronous>, transform_indices = @transform_2, window_bounds = array<i64: 1, 128>}, {transform_indices = @transform_3, window_bounds = array<i64: 256, 128>}]} {
    %c0 = arith.constant 0 : index
    %c0_0 = arith.constant 0 : index
    %0 = vector.load %arg1[%c0, %c0_0] : memref<256x128xbf16, #tpu.memory_space<vmem>>, vector<256x128xbf16>
    %1 = arith.extf %0 : vector<256x128xbf16> to vector<256x128xf32>
    %c0_1 = arith.constant 0 : index
    %c0_2 = arith.constant 0 : index
    %2 = vector.load %arg2[%c0_1, %c0_2] : memref<1x128xf32, #tpu.memory_space<vmem>>, vector<1x128xf32>
    %3 = vector.broadcast %2 : vector<1x128xf32> to vector<256x128xf32>
    %4 = arith.mulf %1, %3 : vector<256x128xf32>
    %c0_3 = arith.constant 0 : index
    %c0_4 = arith.constant 0 : index
    %5 = vector.load %arg3[%c0_3, %c0_4] : memref<1x128xf32, #tpu.memory_space<vmem>>, vector<1x128xf32>
    %6 = vector.broadcast %5 : vector<1x128xf32> to vector<256x128xf32>
    %7 = arith.addf %4, %6 : vector<256x128xf32>
    %cst = arith.constant 0.000000e+00 : f32
    %8 = vector.broadcast %cst : f32 to vector<256x128xf32>
    %9 = arith.maximumf %7, %8 : vector<256x128xf32>
    %c0_5 = arith.constant 0 : index
    %c0_6 = arith.constant 0 : index
    %10 = vector.load %arg4[%c0_5, %c0_6] : memref<256x128xf32, #tpu.memory_space<vmem>>, vector<256x128xf32>
    tpu.vector_store %arg4[%c0_5, %c0_6], %9 {strides = array<i32>} : memref<256x128xf32, #tpu.memory_space<vmem>>, vector<256x128xf32>,
    return
  }
  func.func @transform_0(%arg0: i32) -> (i32, i32) {
    %c0_i32 = arith.constant 0 : i32
    %c0_i32_0 = arith.constant 0 : i32
    return %arg0, %c0_i32 : i32, i32
  }
  func.func @transform_1(%arg0: i32) -> (i32, i32) {
    %c0_i32 = arith.constant 0 : i32
    %c0_i32_0 = arith.constant 0 : i32
    %c0_i32_1 = arith.constant 0 : i32
    return %c0_i32, %c0_i32_0 : i32, i32
  }
  func.func @transform_2(%arg0: i32) -> (i32, i32) {
    %c0_i32 = arith.constant 0 : i32
    %c0_i32_0 = arith.constant 0 : i32
    %c0_i32_1 = arith.constant 0 : i32
    return %c0_i32, %c0_i32_0 : i32, i32
  }
  func.func @transform_3(%arg0: i32) -> (i32, i32) {
    %c0_i32 = arith.constant 0 : i32
    %c0_i32_0 = arith.constant 0 : i32
    return %arg0, %c0_i32 : i32, i32
  }
}

</mosaic_0001>

<llo_original>
// kernel: conv_block_forward.3
$region0: #{conv_block_forward.3}
  #allocation0 [shape = 'u32[]', space=smem, size = 0x4, offset = 0x4, fixed_abs, tag = 'smem constant byte address 0x4 - core index']
  #allocation1 [shape = 'u32[144,128]{1,0:T(1,128)}', space=vmem, size = 0x12000, scoped, tag = 'internal scratch']
  %s0 = inlined_call_operand.vmem [shape: bf16[512,128], index: 0, kind: input, shape index: {}]
  %s1 = inlined_call_operand.vmem [shape: f32[1,128], index: 1, kind: input, shape index: {}]
  %s2 = inlined_call_operand.vmem [shape: f32[1,128], index: 2, kind: input, shape index: {}]
  %s3 = inlined_call_operand.vmem [shape: f32[512,128], index: 3, kind: output, shape index: {}]
  %s4 = sld [smem:[#allocation0]]
  $region45: #{conv_block_forward.3} parent=0
    _
  %s6 = ssub.s32 1, %s4
  %s7 = scalar_select 0, %s6, %s4
  loop: start=0, step=1, limit=4
  $region2: #{conv_block_forward.3} parent=0 // loop_pre_header
    _
  $region3: #{conv_block_forward.3} parent=0 // loop_header
    %s9 = sphi 0, %s13
    %p10 = scmp.ge.s32.totalorder %s9, 4
    %s19 = sphi 0, %s21
    %s22 = sphi 0, %s19
    %s23 = sphi 0, %s22
    %s39 = sphi 0, %s23
    %s43 = sphi 0, %s43
    %s45 = sphi 0, %s43
    %s46 = sphi 0, %s45
    %s60 = sphi 0, %s46
    %s64 = sphi 0, %s64
    %s66 = sphi 0, %s64
    %s67 = sphi 0, %s66
    %s81 = sphi 0, %s67
    %s87 = sphi 0, %s89
    %s90 = sphi 0, %s87
    %s91 = sphi 0, %s90
    %s107 = sphi 0, %s91
  $region4: #{conv_block_forward.3} parent=0 // loop_header_branch
    %12 = sbr.rel (%p10) target = $region8
  $region5: #{conv_block_forward.3} parent=0 // loop_body
    %s14 = ssub.s32 %s9, 1
    %s15 = ssub.s32 %s9, 2
    %s16 = sadd.s32 %s9, 1
    %s17 = ssub.s32 %s9, %s16
    %p18 = scmp.eq.s32.totalorder %s17, 0
    %s20 = sadd.s32 %s19, 1
    %s21 = scalar_select %p18, %s19, %s20
    %p24 = pneg %p18
    %p25 = scmp.eq.s32.totalorder %s9, 1
    %p26 = por %p24, %p25
    %p27 = scmp.ne.s32.totalorder %s19, %s22
    %p28 = scmp.eq.s32.totalorder %s9, 0
    %p29 = por %p27, %p28
    %p30 = scmp.ne.s32.totalorder %s19, %s22
    %p31 = scmp.eq.s32.totalorder %s14, 1
    %p32 = por %p30, %p31
    %p33 = scmp.ne.s32.totalorder %s22, %s23
    %p34 = scmp.eq.s32.totalorder %s14, 0
    %p35 = por %p33, %p34
    %p36 = scmp.ne.s32.totalorder %s22, %s23
    %p37 = scmp.eq.s32.totalorder %s15, 1
    %p38 = por %p36, %p37
    %p40 = scmp.ne.s32.totalorder %s23, %s39
    %p41 = scmp.eq.s32.totalorder %s15, 0
    %p42 = por %p40, %p41
    %s44 = sadd.s32 %s43, 1
    %p47 = scmp.eq.s32.totalorder %s9, 1
    %p48 = scmp.ne.s32.totalorder %s43, %s45
    %p49 = scmp.eq.s32.totalorder %s9, 0
    %p50 = por %p48, %p49
    %p51 = scmp.ne.s32.totalorder %s43, %s45
    %p52 = scmp.eq.s32.totalorder %s14, 1
    %p53 = por %p51, %p52
    %p54 = scmp.ne.s32.totalorder %s45, %s46
    %p55 = scmp.eq.s32.totalorder %s14, 0
    %p56 = por %p54, %p55
    %p57 = scmp.ne.s32.totalorder %s45, %s46
    %p58 = scmp.eq.s32.totalorder %s15, 1
    %p59 = por %p57, %p58
    %p61 = scmp.ne.s32.totalorder %s46, %s60
    %p62 = scmp.eq.s32.totalorder %s15, 0
    %p63 = por %p61, %p62
    %s65 = sadd.s32 %s64, 1
    %p68 = scmp.eq.s32.totalorder %s9, 1
    %p69 = scmp.ne.s32.totalorder %s64, %s66
    %p70 = scmp.eq.s32.totalorder %s9, 0
    %p71 = por %p69, %p70
    %p72 = scmp.ne.s32.totalorder %s64, %s66
    %p73 = scmp.eq.s32.totalorder %s14, 1
    %p74 = por %p72, %p73
    %p75 = scmp.ne.s32.totalorder %s66, %s67
    %p76 = scmp.eq.s32.totalorder %s14, 0
    %p77 = por %p75, %p76
    %p78 = scmp.ne.s32.totalorder %s66, %s67
    %p79 = scmp.eq.s32.totalorder %s15, 1
    %p80 = por %p78, %p79
    %p82 = scmp.ne.s32.totalorder %s67, %s81
    %p83 = scmp.eq.s32.totalorder %s15, 0
    %p84 = por %p82, %p83
    %s85 = ssub.s32 %s9, %s16
    %p86 = scmp.eq.s32.totalorder %s85, 0
    %s88 = sadd.s32 %s87, 1
    %s89 = scalar_select %p86, %s87, %s88
    %p92 = pneg %p86
    %p93 = scmp.eq.s32.totalorder %s9, 1
    %p94 = por %p92, %p93
    %p95 = scmp.ne.s32.totalorder %s87, %s90
    %p96 = scmp.eq.s32.totalorder %s9, 0
    %p97 = por %p95, %p96
    %p98 = scmp.ne.s32.totalorder %s87, %s90
    %p99 = scmp.eq.s32.totalorder %s14, 1
    %p100 = por %p98, %p99
    %p101 = scmp.ne.s32.totalorder %s90, %s91
    %p102 = scmp.eq.s32.totalorder %s14, 0
    %p103 = por %p101, %p102
    %p104 = scmp.ne.s32.totalorder %s90, %s91
    %p105 = scmp.eq.s32.totalorder %s15, 1
    %p106 = por %p104, %p105
    %p108 = scmp.ne.s32.totalorder %s91, %s107
    %p109 = scmp.eq.s32.totalorder %s15, 0
    %p110 = por %p108, %p109
    %p111 = scmp.le.s32.totalorder 1, %s9
    %p112 = scmp.lt.s32.totalorder %s9, 3
    %p113 = pnand %p111, %p112
    %p114 = pneg %p113
    // Predicated region
    $region9: #{conv_block_forward.3} parent=5 // pred_check
      _
    $region10: #{conv_block_forward.3} parent=5 // pred_check_branch
      %116 = sbr.rel (%p113) target = $region12
    $region11: #{conv_block_forward.3} parent=5 // pred_region
      %s117 = ssub.s32 %s9, 1
      // Predicated region
      $region13: #{conv_block_forward.3} parent=11 // pred_check
        %p118 = pneg %p56
      $region14: #{conv_block_forward.3} parent=11 // pred_check_branch
        %120 = sbr.rel (%p118) target = $region16
      $region15: #{conv_block_forward.3} parent=11 // pred_region
        _
      $region16: #{conv_block_forward.3} parent=11 // pred_fallthru
        _
      // Predicated region
      $region17: #{conv_block_forward.3} parent=11 // pred_check
        %p121 = pneg %p77
      $region18: #{conv_block_forward.3} parent=11 // pred_check_branch
        %123 = sbr.rel (%p121) target = $region20
      $region19: #{conv_block_forward.3} parent=11 // pred_region
        _
      $region20: #{conv_block_forward.3} parent=11 // pred_fallthru
        _
    $region12: #{conv_block_forward.3} parent=5 // pred_fallthru
      _
    %p124 = scmp.lt.s32.totalorder %s9, 2
    // Predicated region
    $region21: #{conv_block_forward.3} parent=5 // pred_check
      %p125 = pneg %p124
    $region22: #{conv_block_forward.3} parent=5 // pred_check_branch
      %127 = sbr.rel (%p125) target = $region24
    $region23: #{conv_block_forward.3} parent=5 // pred_region
      // Predicated region
      $region25: #{conv_block_forward.3} parent=23 // pred_check
        %p128 = pneg %p29
      $region26: #{conv_block_forward.3} parent=23 // pred_check_branch
        %130 = sbr.rel (%p128) target = $region28
      $region27: #{conv_block_forward.3} parent=23 // pred_region
        %s131 = smul.u32 32, %s9
        %p132 = scmp.lt.s32.totalorder %s131, 63
        %s133 = scalar_select %p132, %s131, 63
        %s134 = smul.addr %s133, 4
        %s135 = scalar_lea.vmem %s0, %s134
        %s136 = smul.u32 32, %s9
      $region28: #{conv_block_forward.3} parent=23 // pred_fallthru
        _
    $region24: #{conv_block_forward.3} parent=5 // pred_fallthru
      _
    %p137 = scmp.le.s32.totalorder 1, %s9
    %p138 = scmp.lt.s32.totalorder %s9, 3
    %p139 = pnand %p137, %p138
    %p140 = pneg %p139
    // Predicated region
    $region29: #{conv_block_forward.3} parent=5 // pred_check
      _
    $region30: #{conv_block_forward.3} parent=5 // pred_check_branch
      %142 = sbr.rel (%p139) target = $region32
    $region31: #{conv_block_forward.3} parent=5 // pred_region
      %s143 = ssub.s32 %s9, 1
      %s144 = smul.u32 32, %s14
      %p145 = scmp.lt.s32.totalorder %s144, 63
      %s146 = scalar_select %p145, %s144, 63
      %s147 = smul.addr %s146, 4
      %s148 = scalar_lea.vmem %s0, %s147
      %p149 = pneg %p35
      %p150 = pneg %p32
      %p151 = pneg %p56
      %p152 = pneg %p53
      %p153 = pneg %p77
      %p154 = pneg %p74
      %p155 = pneg %p103
      %p156 = pneg %p100
      %s157 = smul.u32 32, %s14
      %p158 = scmp.lt.s32.totalorder %s157, 63
      %s159 = scalar_select %p158, %s157, 63
      %s160 = smul.addr %s159, 8
      %s161 = scalar_lea.vmem %s3, %s160
      %s162 = smul.u32 32, %s14
      %p163 = scmp.lt.s32.totalorder %s162, 63
      %s164 = scalar_select %p163, %s162, 63
      %s165 = smul.addr %s164, 4
      %s166 = scalar_lea.vmem %s0, %s165
      %s167 = smul.u32 32, %s14
      %s168 = smul.u32 32, %s14
      %p169 = scmp.lt.s32.totalorder %s168, 63
      %s170 = scalar_select %p169, %s168, 63
      %s171 = smul.addr %s170, 8
      %s172 = scalar_lea.vmem %s3, %s171
      %s173 = smul.u32 32, %s14
      %v174 = vld [vmem:[%s166] sm:$0xf]
      %v175 = vld [vmem:[%s166 + $0x4] sm:$0xf]
      %v176 = vld [vmem:[%s166 + $0x8] sm:$0xf]
      %v177 = vld [vmem:[%s166 + $0xc] sm:$0xf]
      %v178 = vld [vmem:[%s166 + $0x10] sm:$0xf]
      %v179 = vld [vmem:[%s166 + $0x14] sm:$0xf]
      %v180 = vld [vmem:[%s166 + $0x18] sm:$0xf]
      %v181 = vld [vmem:[%s166 + $0x1c] sm:$0xf]
      %v182 = vld [vmem:[%s166 + $0x20] sm:$0xf]
      %v183 = vld [vmem:[%s166 + $0x24] sm:$0xf]
      %v184 = vld [vmem:[%s166 + $0x28] sm:$0xf]
      %v185 = vld [vmem:[%s166 + $0x2c] sm:$0xf]
      %v186 = vld [vmem:[%s166 + $0x30] sm:$0xf]
      %v187 = vld [vmem:[%s166 + $0x34] sm:$0xf]
      %v188 = vld [vmem:[%s166 + $0x38] sm:$0xf]
      %v189 = vld [vmem:[%s166 + $0x3c] sm:$0xf]
      %v190 = vld [vmem:[%s166 + $0x40] sm:$0xf]
      %v191 = vld [vmem:[%s166 + $0x44] sm:$0xf]
      %v192 = vld [vmem:[%s166 + $0x48] sm:$0xf]
      %v193 = vld [vmem:[%s166 + $0x4c] sm:$0xf]
      %v194 = vld [vmem:[%s166 + $0x50] sm:$0xf]
      %v195 = vld [vmem:[%s166 + $0x54] sm:$0xf]
      %v196 = vld [vmem:[%s166 + $0x58] sm:$0xf]
      %v197 = vld [vmem:[%s166 + $0x5c] sm:$0xf]
      %v198 = vld [vmem:[%s166 + $0x60] sm:$0xf]
      %v199 = vld [vmem:[%s166 + $0x64] sm:$0xf]
      %v200 = vld [vmem:[%s166 + $0x68] sm:$0xf]
      %v201 = vld [vmem:[%s166 + $0x6c] sm:$0xf]
      %v202 = vld [vmem:[%s166 + $0x70] sm:$0xf]
      %v203 = vld [vmem:[%s166 + $0x74] sm:$0xf]
      %v204 = vld [vmem:[%s166 + $0x78] sm:$0xf]
      %v205 = vld [vmem:[%s166 + $0x7c] sm:$0xf]
      %v206 = vunpack.c.l.bf16 %v174
      %v207 = vunpack.c.l.bf16 %v175
      %v208 = vunpack.c.l.bf16 %v176
      %v209 = vunpack.c.l.bf16 %v177
      %v210 = vunpack.c.l.bf16 %v178
      %v211 = vunpack.c.l.bf16 %v179
      %v212 = vunpack.c.l.bf16 %v180
      %v213 = vunpack.c.l.bf16 %v181
      %v214 = vunpack.c.l.bf16 %v182
      %v215 = vunpack.c.l.bf16 %v183
      %v216 = vunpack.c.l.bf16 %v184
      %v217 = vunpack.c.l.bf16 %v185
      %v218 = vunpack.c.l.bf16 %v186
      %v219 = vunpack.c.l.bf16 %v187
      %v220 = vunpack.c.l.bf16 %v188
      %v221 = vunpack.c.l.bf16 %v189
      %v222 = vunpack.c.l.bf16 %v190
      %v223 = vunpack.c.l.bf16 %v191
      %v224 = vunpack.c.l.bf16 %v192
      %v225 = vunpack.c.l.bf16 %v193
      %v226 = vunpack.c.l.bf16 %v194
      %v227 = vunpack.c.l.bf16 %v195
      %v228 = vunpack.c.l.bf16 %v196
      %v229 = vunpack.c.l.bf16 %v197
      %v230 = vunpack.c.l.bf16 %v198
      %v231 = vunpack.c.l.bf16 %v199
      %v232 = vunpack.c.l.bf16 %v200
      %v233 = vunpack.c.l.bf16 %v201
      %v234 = vunpack.c.l.bf16 %v202
      %v235 = vunpack.c.l.bf16 %v203
      %v236 = vunpack.c.l.bf16 %v204
      %v237 = vunpack.c.l.bf16 %v205
      %v238 = vld [vmem:[%s1] sm:$0x1]
      %v240 = vlaneseq
      %v241 = vshrl.u32 %v240, 7
      %v242 = vsub.s32 0, %v241
      %v243 = vrot.slane %v238, %v242
      %v245 = vmul.f32 %v206, %v243
      %v246 = vmul.f32 %v207, %v243
      %v247 = vmul.f32 %v208, %v243
      %v248 = vmul.f32 %v209, %v243
      %v249 = vmul.f32 %v210, %v243
      %v250 = vmul.f32 %v211, %v243
      %v251 = vmul.f32 %v212, %v243
      %v252 = vmul.f32 %v213, %v243
      %v253 = vmul.f32 %v214, %v243
      %v254 = vmul.f32 %v215, %v243
      %v255 = vmul.f32 %v216, %v243
      %v256 = vmul.f32 %v217, %v243
      %v257 = vmul.f32 %v218, %v243
      %v258 = vmul.f32 %v219, %v243
      %v259 = vmul.f32 %v220, %v243
      %v260 = vmul.f32 %v221, %v243
      %v261 = vmul.f32 %v222, %v243
      %v262 = vmul.f32 %v223, %v243
      %v263 = vmul.f32 %v224, %v243
      %v264 = vmul.f32 %v225, %v243
      %v265 = vmul.f32 %v226, %v243
      %v266 = vmul.f32 %v227, %v243
      %v267 = vmul.f32 %v228, %v243
      %v268 = vmul.f32 %v229, %v243
      %v269 = vmul.f32 %v230, %v243
      %v270 = vmul.f32 %v231, %v243
      %v271 = vmul.f32 %v232, %v243
      %v272 = vmul.f32 %v233, %v243
      %v273 = vmul.f32 %v234, %v243
      %v274 = vmul.f32 %v235, %v243
      %v275 = vmul.f32 %v236, %v243
      %v276 = vmul.f32 %v237, %v243
      %v277 = vld [vmem:[%s2] sm:$0x1]
      %v279 = vlaneseq
      %v280 = vshrl.u32 %v279, 7
      %v281 = vsub.s32 0, %v280
      %v282 = vrot.slane %v277, %v281
      %v284 = vadd.f32 %v245, %v282
      %v285 = vadd.f32 %v246, %v282
      %v286 = vadd.f32 %v247, %v282
      %v287 = vadd.f32 %v248, %v282
      %v288 = vadd.f32 %v249, %v282
      %v289 = vadd.f32 %v250, %v282
      %v290 = vadd.f32 %v251, %v282
      %v291 = vadd.f32 %v252, %v282
      %v292 = vadd.f32 %v253, %v282
      %v293 = vadd.f32 %v254, %v282
      %v294 = vadd.f32 %v255, %v282
      %v295 = vadd.f32 %v256, %v282
      %v296 = vadd.f32 %v257, %v282
      %v297 = vadd.f32 %v258, %v282
      %v298 = vadd.f32 %v259, %v282
      %v299 = vadd.f32 %v260, %v282
      %v300 = vadd.f32 %v261, %v282
      %v301 = vadd.f32 %v262, %v282
      %v302 = vadd.f32 %v263, %v282
      %v303 = vadd.f32 %v264, %v282
      %v304 = vadd.f32 %v265, %v282
      %v305 = vadd.f32 %v266, %v282
      %v306 = vadd.f32 %v267, %v282
      %v307 = vadd.f32 %v268, %v282
      %v308 = vadd.f32 %v269, %v282
      %v309 = vadd.f32 %v270, %v282
      %v310 = vadd.f32 %v271, %v282
      %v311 = vadd.f32 %v272, %v282
      %v312 = vadd.f32 %v273, %v282
      %v313 = vadd.f32 %v274, %v282
      %v314 = vadd.f32 %v275, %v282
      %v315 = vadd.f32 %v276, %v282
      %v316 = vmax.f32 %v284, 0.0
      %v317 = vmax.f32 %v285, 0.0
      %v318 = vmax.f32 %v286, 0.0
      %v319 = vmax.f32 %v287, 0.0
      %v320 = vmax.f32 %v288, 0.0
      %v321 = vmax.f32 %v289, 0.0
      %v322 = vmax.f32 %v290, 0.0
      %v323 = vmax.f32 %v291, 0.0
      %v324 = vmax.f32 %v292, 0.0
      %v325 = vmax.f32 %v293, 0.0
      %v326 = vmax.f32 %v294, 0.0
      %v327 = vmax.f32 %v295, 0.0
      %v328 = vmax.f32 %v296, 0.0
      %v329 = vmax.f32 %v297, 0.0
      %v330 = vmax.f32 %v298, 0.0
      %v331 = vmax.f32 %v299, 0.0
      %v332 = vmax.f32 %v300, 0.0
      %v333 = vmax.f32 %v301, 0.0
      %v334 = vmax.f32 %v302, 0.0
      %v335 = vmax.f32 %v303, 0.0
      %v336 = vmax.f32 %v304, 0.0
      %v337 = vmax.f32 %v305, 0.0
      %v338 = vmax.f32 %v306, 0.0
      %v339 = vmax.f32 %v307, 0.0
      %v340 = vmax.f32 %v308, 0.0
      %v341 = vmax.f32 %v309, 0.0
      %v342 = vmax.f32 %v310, 0.0
      %v343 = vmax.f32 %v311, 0.0
      %v344 = vmax.f32 %v312, 0.0
      %v345 = vmax.f32 %v313, 0.0
      %v346 = vmax.f32 %v314, 0.0
      %v347 = vmax.f32 %v315, 0.0
      %348 = vst [vmem:[%s172] sm:$0xff] %v316
      %349 = vst [vmem:[%s172 + $0x8] sm:$0xff] %v317
      %350 = vst [vmem:[%s172 + $0x10] sm:$0xff] %v318
      %351 = vst [vmem:[%s172 + $0x18] sm:$0xff] %v319
      %352 = vst [vmem:[%s172 + $0x20] sm:$0xff] %v320
      %353 = vst [vmem:[%s172 + $0x28] sm:$0xff] %v321
      %354 = vst [vmem:[%s172 + $0x30] sm:$0xff] %v322
      %355 = vst [vmem:[%s172 + $0x38] sm:$0xff] %v323
      %356 = vst [vmem:[%s172 + $0x40] sm:$0xff] %v324
      %357 = vst [vmem:[%s172 + $0x48] sm:$0xff] %v325
      %358 = vst [vmem:[%s172 + $0x50] sm:$0xff] %v326
      %359 = vst [vmem:[%s172 + $0x58] sm:$0xff] %v327
      %360 = vst [vmem:[%s172 + $0x60] sm:$0xff] %v328
      %361 = vst [vmem:[%s172 + $0x68] sm:$0xff] %v329
      %362 = vst [vmem:[%s172 + $0x70] sm:$0xff] %v330
      %363 = vst [vmem:[%s172 + $0x78] sm:$0xff] %v331
      %364 = vst [vmem:[%s172 + $0x80] sm:$0xff] %v332
      %365 = vst [vmem:[%s172 + $0x88] sm:$0xff] %v333
      %366 = vst [vmem:[%s172 + $0x90] sm:$0xff] %v334
      %367 = vst [vmem:[%s172 + $0x98] sm:$0xff] %v335
      %368 = vst [vmem:[%s172 + $0xa0] sm:$0xff] %v336
      %369 = vst [vmem:[%s172 + $0xa8] sm:$0xff] %v337
      %370 = vst [vmem:[%s172 + $0xb0] sm:$0xff] %v338
      %371 = vst [vmem:[%s172 + $0xb8] sm:$0xff] %v339
      %372 = vst [vmem:[%s172 + $0xc0] sm:$0xff] %v340
      %373 = vst [vmem:[%s172 + $0xc8] sm:$0xff] %v341
      %374 = vst [vmem:[%s172 + $0xd0] sm:$0xff] %v342
      %375 = vst [vmem:[%s172 + $0xd8] sm:$0xff] %v343
      %376 = vst [vmem:[%s172 + $0xe0] sm:$0xff] %v344
      %377 = vst [vmem:[%s172 + $0xe8] sm:$0xff] %v345
      %378 = vst [vmem:[%s172 + $0xf0] sm:$0xff] %v346
      %379 = vst [vmem:[%s172 + $0xf8] sm:$0xff] %v347
      %s380 = smul.u32 32, %s14
      %p381 = scmp.lt.s32.totalorder %s380, 63
      %s382 = scalar_select %p381, %s380, 63
      %s383 = smul.addr %s382, 8
      %s384 = scalar_lea.vmem %s3, %s383
      // Predicated region
      $region33: #{conv_block_forward.3} parent=31 // pred_check
        %p385 = pneg %p100
      $region34: #{conv_block_forward.3} parent=31 // pred_check_branch
        %387 = sbr.rel (%p385) target = $region36
      $region35: #{conv_block_forward.3} parent=31 // pred_region
        %s388 = smul.u32 32, %s14
      $region36: #{conv_block_forward.3} parent=31 // pred_fallthru
        _
    $region32: #{conv_block_forward.3} parent=5 // pred_fallthru
      _
    %p389 = scmp.le.s32.totalorder 2, %s9
    // Predicated region
    $region37: #{conv_block_forward.3} parent=5 // pred_check
      %p390 = pneg %p389
    $region38: #{conv_block_forward.3} parent=5 // pred_check_branch
      %392 = sbr.rel (%p390) target = $region40
    $region39: #{conv_block_forward.3} parent=5 // pred_region
      %s393 = ssub.s32 %s9, 2
      // Predicated region
      $region41: #{conv_block_forward.3} parent=39 // pred_check
        %p394 = pneg %p106
      $region42: #{conv_block_forward.3} parent=39 // pred_check_branch
        %396 = sbr.rel (%p394) target = $region44
      $region43: #{conv_block_forward.3} parent=39 // pred_region
        %s397 = smul.u32 32, %s15
        %p398 = scmp.lt.s32.totalorder %s397, 63
        %s399 = scalar_select %p398, %s397, 63
        %s400 = smul.addr %s399, 8
        %s401 = scalar_lea.vmem %s3, %s400
      $region44: #{conv_block_forward.3} parent=39 // pred_fallthru
        _
    $region40: #{conv_block_forward.3} parent=5 // pred_fallthru
      _
  $region6: #{conv_block_forward.3} parent=0 // loop_footer
    %s13 = sadd.s32 1, %s9
  $region7: #{conv_block_forward.3} parent=0 // loop_footer_branch
    %8 = sbr.rel target = $region3
  $region8: #{conv_block_forward.3} parent=0 // loop_exit
    _

// kernel: conv_block_forward.2
$region0: #{conv_block_forward.2}
  #allocation0 [shape = 'u32[]', space=smem, size = 0x4, offset = 0x4, fixed_abs, tag = 'smem constant byte address 0x4 - core index']
  #allocation1 [shape = 'u32[144,128]{1,0:T(1,128)}', space=vmem, size = 0x12000, scoped, tag = 'internal scratch']
  %s0 = inlined_call_operand.vmem [shape: bf16[512,40], index: 0, kind: input, shape index: {}]
  %s1 = inlined_call_operand.vmem [shape: bf16[40,128], index: 1, kind: input, shape index: {}]
  %s2 = inlined_call_operand.vmem [shape: bf16[512,128], index: 2, kind: output, shape index: {0}]
  %s3 = inlined_call_operand.vmem [shape: f32[1,128], index: 3, kind: output, shape index: {1}]
  %s4 = inlined_call_operand.vmem [shape: f32[1,128], index: 4, kind: output, shape index: {2}]
  %5 = xla_tuple %s2, %s3, %s4
  %s6 = sld [smem:[#allocation0]]
  $region61: #{conv_block_forward.2} parent=0
    _
  %s8 = ssub.s32 1, %s6
  %s9 = scalar_select 0, %s8, %s6
  loop: start=0, step=1, limit=4
  $region2: #{conv_block_forward.2} parent=0 // loop_pre_header
    _
  $region3: #{conv_block_forward.2} parent=0 // loop_header
    %s11 = sphi 0, %s15
    %p12 = scmp.ge.s32.totalorder %s11, 4
    %s21 = sphi 0, %s23
    %s24 = sphi 0, %s21
    %s25 = sphi 0, %s24
    %s41 = sphi 0, %s25
    %s45 = sphi 0, %s45
    %s47 = sphi 0, %s45
    %s48 = sphi 0, %s47
    %s62 = sphi 0, %s48
    %s68 = sphi 0, %s70
    %s71 = sphi 0, %s68
    %s72 = sphi 0, %s71
    %s88 = sphi 0, %s72
    %s92 = sphi 0, %s92
    %s94 = sphi 0, %s92
    %s95 = sphi 0, %s94
    %s109 = sphi 0, %s95
    %s113 = sphi 0, %s113
    %s115 = sphi 0, %s113
    %s116 = sphi 0, %s115
    %s130 = sphi 0, %s116
  $region4: #{conv_block_forward.2} parent=0 // loop_header_branch
    %14 = sbr.rel (%p12) target = $region8
  $region5: #{conv_block_forward.2} parent=0 // loop_body
    %s16 = ssub.s32 %s11, 1
    %s17 = ssub.s32 %s11, 2
    %s18 = sadd.s32 %s11, 1
    %s19 = ssub.s32 %s11, %s18
    %p20 = scmp.eq.s32.totalorder %s19, 0
    %s22 = sadd.s32 %s21, 1
    %s23 = scalar_select %p20, %s21, %s22
    %p26 = pneg %p20
    %p27 = scmp.eq.s32.totalorder %s11, 1
    %p28 = por %p26, %p27
    %p29 = scmp.ne.s32.totalorder %s21, %s24
    %p30 = scmp.eq.s32.totalorder %s11, 0
    %p31 = por %p29, %p30
    %p32 = scmp.ne.s32.totalorder %s21, %s24
    %p33 = scmp.eq.s32.totalorder %s16, 1
    %p34 = por %p32, %p33
    %p35 = scmp.ne.s32.totalorder %s24, %s25
    %p36 = scmp.eq.s32.totalorder %s16, 0
    %p37 = por %p35, %p36
    %p38 = scmp.ne.s32.totalorder %s24, %s25
    %p39 = scmp.eq.s32.totalorder %s17, 1
    %p40 = por %p38, %p39
    %p42 = scmp.ne.s32.totalorder %s25, %s41
    %p43 = scmp.eq.s32.totalorder %s17, 0
    %p44 = por %p42, %p43
    %s46 = sadd.s32 %s45, 1
    %p49 = scmp.eq.s32.totalorder %s11, 1
    %p50 = scmp.ne.s32.totalorder %s45, %s47
    %p51 = scmp.eq.s32.totalorder %s11, 0
    %p52 = por %p50, %p51
    %p53 = scmp.ne.s32.totalorder %s45, %s47
    %p54 = scmp.eq.s32.totalorder %s16, 1
    %p55 = por %p53, %p54
    %p56 = scmp.ne.s32.totalorder %s47, %s48
    %p57 = scmp.eq.s32.totalorder %s16, 0
    %p58 = por %p56, %p57
    %p59 = scmp.ne.s32.totalorder %s47, %s48
    %p60 = scmp.eq.s32.totalorder %s17, 1
    %p61 = por %p59, %p60
    %p63 = scmp.ne.s32.totalorder %s48, %s62
    %p64 = scmp.eq.s32.totalorder %s17, 0
    %p65 = por %p63, %p64
    %s66 = ssub.s32 %s11, %s18
    %p67 = scmp.eq.s32.totalorder %s66, 0
    %s69 = sadd.s32 %s68, 1
    %s70 = scalar_select %p67, %s68, %s69
    %p73 = pneg %p67
    %p74 = scmp.eq.s32.totalorder %s11, 1
    %p75 = por %p73, %p74
    %p76 = scmp.ne.s32.totalorder %s68, %s71
    %p77 = scmp.eq.s32.totalorder %s11, 0
    %p78 = por %p76, %p77
    %p79 = scmp.ne.s32.totalorder %s68, %s71
    %p80 = scmp.eq.s32.totalorder %s16, 1
    %p81 = por %p79, %p80
    %p82 = scmp.ne.s32.totalorder %s71, %s72
    %p83 = scmp.eq.s32.totalorder %s16, 0
    %p84 = por %p82, %p83
    %p85 = scmp.ne.s32.totalorder %s71, %s72
    %p86 = scmp.eq.s32.totalorder %s17, 1
    %p87 = por %p85, %p86
    %p89 = scmp.ne.s32.totalorder %s72, %s88
    %p90 = scmp.eq.s32.totalorder %s17, 0
    %p91 = por %p89, %p90
    %s93 = sadd.s32 %s92, 1
    %p96 = scmp.eq.s32.totalorder %s11, 1
    %p97 = scmp.ne.s32.totalorder %s92, %s94
    %p98 = scmp.eq.s32.totalorder %s11, 0
    %p99 = por %p97, %p98
    %p100 = scmp.ne.s32.totalorder %s92, %s94
    %p101 = scmp.eq.s32.totalorder %s16, 1
    %p102 = por %p100, %p101
    %p103 = scmp.ne.s32.totalorder %s94, %s95
    %p104 = scmp.eq.s32.totalorder %s16, 0
    %p105 = por %p103, %p104
    %p106 = scmp.ne.s32.totalorder %s94, %s95
    %p107 = scmp.eq.s32.totalorder %s17, 1
    %p108 = por %p106, %p107
    %p110 = scmp.ne.s32.totalorder %s95, %s109
    %p111 = scmp.eq.s32.totalorder %s17, 0
    %p112 = por %p110, %p111
    %s114 = sadd.s32 %s113, 1
    %p117 = scmp.eq.s32.totalorder %s11, 1
    %p118 = scmp.ne.s32.totalorder %s113, %s115
    %p119 = scmp.eq.s32.totalorder %s11, 0
    %p120 = por %p118, %p119
    %p121 = scmp.ne.s32.totalorder %s113, %s115
    %p122 = scmp.eq.s32.totalorder %s16, 1
    %p123 = por %p121, %p122
    %p124 = scmp.ne.s32.totalorder %s115, %s116
    %p125 = scmp.eq.s32.totalorder %s16, 0
    %p126 = por %p124, %p125
    %p127 = scmp.ne.s32.totalorder %s115, %s116
    %p128 = scmp.eq.s32.totalorder %s17, 1
    %p129 = por %p127, %p128
    %p131 = scmp.ne.s32.totalorder %s116, %s130
    %p132 = scmp.eq.s32.totalorder %s17, 0
    %p133 = por %p131, %p132
    %p134 = scmp.le.s32.totalorder 1, %s11
    %p135 = scmp.lt.s32.totalorder %s11, 3
    %p136 = pnand %p134, %p135
    %p137 = pneg %p136
    // Predicated region
    $region9: #{conv_block_forward.2} parent=5 // pred_check
      _
    $region10: #{conv_block_forward.2} parent=5 // pred_check_branch
      %139 = sbr.rel (%p136) target = $region12
    $region11: #{conv_block_forward.2} parent=5 // pred_region
      %s140 = ssub.s32 %s11, 1
      // Predicated region
      $region13: #{conv_block_forward.2} parent=11 // pred_check
        %p141 = pneg %p58
      $region14: #{conv_block_forward.2} parent=11 // pred_check_branch
        %143 = sbr.rel (%p141) target = $region16
      $region15: #{conv_block_forward.2} parent=11 // pred_region
        _
      $region16: #{conv_block_forward.2} parent=11 // pred_fallthru
        _
    $region12: #{conv_block_forward.2} parent=5 // pred_fallthru
      _
    %p144 = scmp.lt.s32.totalorder %s11, 2
    // Predicated region
    $region17: #{conv_block_forward.2} parent=5 // pred_check
      %p145 = pneg %p144
    $region18: #{conv_block_forward.2} parent=5 // pred_check_branch
      %147 = sbr.rel (%p145) target = $region20
    $region19: #{conv_block_forward.2} parent=5 // pred_region
      // Predicated region
      $region21: #{conv_block_forward.2} parent=19 // pred_check
        %p148 = pneg %p31
      $region22: #{conv_block_forward.2} parent=19 // pred_check_branch
        %150 = sbr.rel (%p148) target = $region24
      $region23: #{conv_block_forward.2} parent=19 // pred_region
        %s151 = smul.u32 32, %s11
        %p152 = scmp.lt.s32.totalorder %s151, 63
        %s153 = scalar_select %p152, %s151, 63
        %s154 = smul.addr %s153, 4
        %s155 = scalar_lea.vmem %s0, %s154
        %s156 = smul.u32 32, %s11
      $region24: #{conv_block_forward.2} parent=19 // pred_fallthru
        _
    $region20: #{conv_block_forward.2} parent=5 // pred_fallthru
      _
    %p157 = scmp.le.s32.totalorder 1, %s11
    %p158 = scmp.lt.s32.totalorder %s11, 3
    %p159 = pnand %p157, %p158
    %p160 = pneg %p159
    // Predicated region
    $region25: #{conv_block_forward.2} parent=5 // pred_check
      _
    $region26: #{conv_block_forward.2} parent=5 // pred_check_branch
      %162 = sbr.rel (%p159) target = $region28
    $region27: #{conv_block_forward.2} parent=5 // pred_region
      %s163 = ssub.s32 %s11, 1
      %s164 = smul.u32 32, %s16
      %p165 = scmp.lt.s32.totalorder %s164, 63
      %s166 = scalar_select %p165, %s164, 63
      %s167 = smul.addr %s166, 4
      %s168 = scalar_lea.vmem %s0, %s167
      %p169 = pneg %p37
      %p170 = pneg %p34
      %p171 = pneg %p58
      %p172 = pneg %p55
      %p173 = pneg %p84
      %p174 = pneg %p81
      %s175 = smul.u32 32, %s16
      %p176 = scmp.lt.s32.totalorder %s175, 63
      %s177 = scalar_select %p176, %s175, 63
      %s178 = smul.addr %s177, 4
      %s179 = scalar_lea.vmem %s2, %s178
      %p180 = pneg %p105
      %p181 = pneg %p102
      %p182 = pneg %p126
      %p183 = pneg %p123
      %s184 = smul.u32 32, %s16
      %p185 = scmp.lt.s32.totalorder %s184, 63
      %s186 = scalar_select %p185, %s184, 63
      %s187 = smul.addr %s186, 4
      %s188 = scalar_lea.vmem %s0, %s187
      %s189 = smul.u32 32, %s16
      %s190 = smul.u32 32, %s16
      %p191 = scmp.lt.s32.totalorder %s190, 63
      %s192 = scalar_select %p191, %s190, 63
      %s193 = smul.addr %s192, 4
      %s194 = scalar_lea.vmem %s2, %s193
      %s195 = smul.u32 32, %s16
      %p197 = scmp.eq.s32.totalorder %s16, 0
      // Predicated region
      $region29: #{conv_block_forward.2} parent=27 // pred_check
        %p198 = pneg %p197
      $region30: #{conv_block_forward.2} parent=27 // pred_check_branch
        %200 = sbr.rel (%p198) target = $region32
      $region31: #{conv_block_forward.2} parent=27 // pred_region
        %201 = vst [vmem:[%s3] sm:$0x1] 0.0
        %202 = vst [vmem:[%s4] sm:$0x1] 0.0
      $region32: #{conv_block_forward.2} parent=27 // pred_fallthru
        _
      %v203 = vld [vmem:[%s188] sm:$0xf]
      %v204 = vld [vmem:[%s188 + $0x4] sm:$0xf]
      %v205 = vld [vmem:[%s188 + $0x8] sm:$0xf]
      %v206 = vld [vmem:[%s188 + $0xc] sm:$0xf]
      %v207 = vld [vmem:[%s188 + $0x10] sm:$0xf]
      %v208 = vld [vmem:[%s188 + $0x14] sm:$0xf]
      %v209 = vld [vmem:[%s188 + $0x18] sm:$0xf]
      %v210 = vld [vmem:[%s188 + $0x1c] sm:$0xf]
      %v211 = vld [vmem:[%s188 + $0x20] sm:$0xf]
      %v212 = vld [vmem:[%s188 + $0x24] sm:$0xf]
      %v213 = vld [vmem:[%s188 + $0x28] sm:$0xf]
      %v214 = vld [vmem:[%s188 + $0x2c] sm:$0xf]
      %v215 = vld [vmem:[%s188 + $0x30] sm:$0xf]
      %v216 = vld [vmem:[%s188 + $0x34] sm:$0xf]
      %v217 = vld [vmem:[%s188 + $0x38] sm:$0xf]
      %v218 = vld [vmem:[%s188 + $0x3c] sm:$0xf]
      %v219 = vld [vmem:[%s188 + $0x40] sm:$0xf]
      %v220 = vld [vmem:[%s188 + $0x44] sm:$0xf]
      %v221 = vld [vmem:[%s188 + $0x48] sm:$0xf]
      %v222 = vld [vmem:[%s188 + $0x4c] sm:$0xf]
      %v223 = vld [vmem:[%s188 + $0x50] sm:$0xf]
      %v224 = vld [vmem:[%s188 + $0x54] sm:$0xf]
      %v225 = vld [vmem:[%s188 + $0x58] sm:$0xf]
      %v226 = vld [vmem:[%s188 + $0x5c] sm:$0xf]
      %v227 = vld [vmem:[%s188 + $0x60] sm:$0xf]
      %v228 = vld [vmem:[%s188 + $0x64] sm:$0xf]
      %v229 = vld [vmem:[%s188 + $0x68] sm:$0xf]
      %v230 = vld [vmem:[%s188 + $0x6c] sm:$0xf]
      %v231 = vld [vmem:[%s188 + $0x70] sm:$0xf]
      %v232 = vld [vmem:[%s188 + $0x74] sm:$0xf]
      %v233 = vld [vmem:[%s188 + $0x78] sm:$0xf]
      %v234 = vld [vmem:[%s188 + $0x7c] sm:$0xf]
      %v235 = vld [vmem:[%s1] sm:$0xf]
      %v236 = vld [vmem:[%s1 + $0x4] sm:$0xf]
      %v237 = vld [vmem:[%s1 + $0x8] sm:$0xf]
      %v238 = vld [vmem:[%s1 + $0xc] sm:$0xf]
      %v239 = vld [vmem:[%s1 + $0x10] sm:$0xf]
      %v272 = vunpack.c.l.b16 %v203
      %v273 = vunpack.c.l.b16 %v204
      %v274 = vunpack.c.l.b16 %v205
      %v275 = vunpack.c.l.b16 %v206
      %v276 = vunpack.c.l.b16 %v207
      %v277 = vunpack.c.l.b16 %v208
      %v278 = vunpack.c.l.b16 %v209
      %v279 = vunpack.c.l.b16 %v210
      %v280 = vunpack.c.l.b16 %v211
      %v281 = vunpack.c.l.b16 %v212
      %v282 = vunpack.c.l.b16 %v213
      %v283 = vunpack.c.l.b16 %v214
      %v284 = vunpack.c.l.b16 %v215
      %v285 = vunpack.c.l.b16 %v216
      %v286 = vunpack.c.l.b16 %v217
      %v287 = vunpack.c.l.b16 %v218
      %v288 = vunpack.c.l.b16 %v219
      %v289 = vunpack.c.l.b16 %v220
      %v290 = vunpack.c.l.b16 %v221
      %v291 = vunpack.c.l.b16 %v222
      %v292 = vunpack.c.l.b16 %v223
      %v293 = vunpack.c.l.b16 %v224
      %v294 = vunpack.c.l.b16 %v225
      %v295 = vunpack.c.l.b16 %v226
      %v296 = vunpack.c.l.b16 %v227
      %v297 = vunpack.c.l.b16 %v228
      %v298 = vunpack.c.l.b16 %v229
      %v299 = vunpack.c.l.b16 %v230
      %v300 = vunpack.c.l.b16 %v231
      %v301 = vunpack.c.l.b16 %v232
      %v302 = vunpack.c.l.b16 %v233
      %v303 = vunpack.c.l.b16 %v234
      %v304 = vpack.c.b16 %v273, %v272
      %v305 = vpack.c.b16 %v275, %v274
      %v306 = vpack.c.b16 %v277, %v276
      %v307 = vpack.c.b16 %v279, %v278
      %v308 = vpack.c.b16 %v281, %v280
      %v309 = vpack.c.b16 %v283, %v282
      %v310 = vpack.c.b16 %v285, %v284
      %v311 = vpack.c.b16 %v287, %v286
      %v312 = vpack.c.b16 %v289, %v288
      %v313 = vpack.c.b16 %v291, %v290
      %v314 = vpack.c.b16 %v293, %v292
      %v315 = vpack.c.b16 %v295, %v294
      %v316 = vpack.c.b16 %v297, %v296
      %v317 = vpack.c.b16 %v299, %v298
      %v318 = vpack.c.b16 %v301, %v300
      %v319 = vpack.c.b16 %v303, %v302
      %v325 = vunpack.c.l.b16 %v235
      %v326 = vunpack.c.l.b16 %v236
      %v327 = vunpack.c.l.b16 %v237
      %v328 = vunpack.c.l.b16 %v238
      %v329 = vunpack.c.l.b16 %v239
      %v330 = vpack.c.b16 %v326, %v325
      %v331 = vpack.c.b16 %v328, %v327
      %v332 = vpack.c.b16 %v329, %v329
      %vm335 = vcmask 326656
      %v337 = vsel %vm335, %v304, 0
      %v340 = vsel %vm335, %v305, 0
      %v343 = vsel %vm335, %v306, 0
      %v346 = vsel %vm335, %v307, 0
      %v349 = vsel %vm335, %v308, 0
      %v352 = vsel %vm335, %v309, 0
      %v355 = vsel %vm335, %v310, 0
      %v358 = vsel %vm335, %v311, 0
      %v361 = vsel %vm335, %v312, 0
      %v364 = vsel %vm335, %v313, 0
      %v367 = vsel %vm335, %v314, 0
      %v370 = vsel %vm335, %v315, 0
      %v373 = vsel %vm335, %v316, 0
      %v376 = vsel %vm335, %v317, 0
      %v379 = vsel %vm335, %v318, 0
      %v382 = vsel %vm335, %v319, 0
      %vm384 = vcmask 1043456
      %v386 = vsel %vm384, %v332, 0
      %388 = vmatprep.subr.bf16.mxu0 0
      %389 = vmatpush1.bf16.msra.mxu0 0
      %390 = vmatprep.subr.bf16.mxu0 0
      %391 = vmatpush1.bf16.msra.mxu0 0
      %392 = vmatprep.subr.bf16.mxu0 0
      %393 = vmatpush1.bf16.msra.mxu0 0
      %394 = vmatprep.subr.bf16.mxu0 0
      %395 = vmatpush1.bf16.msra.mxu0 0
      %396 = vmatprep.subr.bf16.mxu0 0
      %397 = vmatpush1.bf16.msra.mxu0 0
      %398 = vmatprep.subr.bf16.mxu0 0
      %399 = vmatpush1.bf16.msra.mxu0 %v386
      %400 = vmatprep.subr.bf16.mxu0 0
      %401 = vmatpush1.bf16.msra.mxu0 %v331
      %402 = vmatprep.subr.bf16.mxu0 0
      %403 = vmatpush1.bf16.msra.mxu0 %v330
      %404 = vmatprep.subr.bf16.mxu0 0
      %405 = vmatpush2.bf16.msra.mxu0 0
      %406 = vmatprep.subr.bf16.mxu0 0
      %407 = vmatpush2.bf16.msra.mxu0 0
      %408 = vmatprep.subr.bf16.mxu0 0
      %409 = vmatpush2.bf16.msra.mxu0 0
      %410 = vmatprep.subr.bf16.mxu0 0
      %411 = vmatpush2.bf16.msra.mxu0 0
      %412 = vmatprep.subr.bf16.mxu0 0
      %413 = vmatpush2.bf16.msra.mxu0 0
      %414 = vmatprep.subr.bf16.mxu0 0
      %415 = vmatpush2.bf16.msra.mxu0 0
      %416 = vmatprep.subr.bf16.mxu0 0
      %417 = vmatpush2.bf16.msra.mxu0 0
      %418 = vmatprep.subr.bf16.mxu0 0
      %419 = vmatpush2.bf16.msra.mxu0 0
      %420 = vmatprep.mubr.bf16.mxu0 0
      %421 = vmatmul.mubr.bf16.gmra.mxu0 %v337
      %v422 = vpop.f32.mrf.mxu0
      %v423 = vadd.f32 0.0, %v422
      %v424 = vpop.f32.mrf.mxu0
      %v425 = vpop.f32.mrf.mxu0
      %v426 = vadd.f32 0.0, %v425
      %v427 = vpop.f32.mrf.mxu0
      %428 = vmatprep.mubr.bf16.mxu0 0
      %429 = vmatmul.mubr.bf16.gmra.mxu0 %v340
      %v430 = vpop.f32.mrf.mxu0
      %v431 = vadd.f32 0.0, %v430
      %v432 = vpop.f32.mrf.mxu0
      %v433 = vpop.f32.mrf.mxu0
      %v434 = vadd.f32 0.0, %v433
      %v435 = vpop.f32.mrf.mxu0
      %436 = vmatprep.mubr.bf16.mxu0 0
      %437 = vmatmul.mubr.bf16.gmra.mxu0 %v343
      %v438 = vpop.f32.mrf.mxu0
      %v439 = vadd.f32 0.0, %v438
      %v440 = vpop.f32.mrf.mxu0
      %v441 = vpop.f32.mrf.mxu0
      %v442 = vadd.f32 0.0, %v441
      %v443 = vpop.f32.mrf.mxu0
      %444 = vmatprep.mubr.bf16.mxu0 0
      %445 = vmatmul.mubr.bf16.gmra.mxu0 %v346
      %v446 = vpop.f32.mrf.mxu0
      %v447 = vadd.f32 0.0, %v446
      %v448 = vpop.f32.mrf.mxu0
      %v449 = vpop.f32.mrf.mxu0
      %v450 = vadd.f32 0.0, %v449
      %v451 = vpop.f32.mrf.mxu0
      %452 = vmatprep.mubr.bf16.mxu0 0
      %453 = vmatmul.mubr.bf16.gmra.mxu0 %v349
      %v454 = vpop.f32.mrf.mxu0
      %v455 = vadd.f32 0.0, %v454
      %v456 = vpop.f32.mrf.mxu0
      %v457 = vpop.f32.mrf.mxu0
      %v458 = vadd.f32 0.0, %v457
      %v459 = vpop.f32.mrf.mxu0
      %460 = vmatprep.mubr.bf16.mxu0 0
      %461 = vmatmul.mubr.bf16.gmra.mxu0 %v352
      %v462 = vpop.f32.mrf.mxu0
      %v463 = vadd.f32 0.0, %v462
      %v464 = vpop.f32.mrf.mxu0
      %v465 = vpop.f32.mrf.mxu0
      %v466 = vadd.f32 0.0, %v465
      %v467 = vpop.f32.mrf.mxu0
      %468 = vmatprep.mubr.bf16.mxu0 0
      %469 = vmatmul.mubr.bf16.gmra.mxu0 %v355
      %v470 = vpop.f32.mrf.mxu0
      %v471 = vadd.f32 0.0, %v470
      %v472 = vpop.f32.mrf.mxu0
      %v473 = vpop.f32.mrf.mxu0
      %v474 = vadd.f32 0.0, %v473
      %v475 = vpop.f32.mrf.mxu0
      %476 = vmatprep.mubr.bf16.mxu0 0
      %477 = vmatmul.mubr.bf16.gmra.mxu0 %v358
      %v478 = vpop.f32.mrf.mxu0
      %v479 = vadd.f32 0.0, %v478
      %v480 = vpop.f32.mrf.mxu0
      %v481 = vpop.f32.mrf.mxu0
      %v482 = vadd.f32 0.0, %v481
      %v483 = vpop.f32.mrf.mxu0
      %484 = vmatprep.mubr.bf16.mxu0 0
      %485 = vmatmul.mubr.bf16.gmra.mxu0 %v361
      %v486 = vpop.f32.mrf.mxu0
      %v487 = vadd.f32 0.0, %v486
      %v488 = vpop.f32.mrf.mxu0
      %v489 = vpop.f32.mrf.mxu0
      %v490 = vadd.f32 0.0, %v489
      %v491 = vpop.f32.mrf.mxu0
      %492 = vmatprep.mubr.bf16.mxu0 0
      %493 = vmatmul.mubr.bf16.gmra.mxu0 %v364
      %v494 = vpop.f32.mrf.mxu0
      %v495 = vadd.f32 0.0, %v494
      %v496 = vpop.f32.mrf.mxu0
      %v497 = vpop.f32.mrf.mxu0
      %v498 = vadd.f32 0.0, %v497
      %v499 = vpop.f32.mrf.mxu0
      %500 = vmatprep.mubr.bf16.mxu0 0
      %501 = vmatmul.mubr.bf16.gmra.mxu0 %v367
      %v502 = vpop.f32.mrf.mxu0
      %v503 = vadd.f32 0.0, %v502
      %v504 = vpop.f32.mrf.mxu0
      %v505 = vpop.f32.mrf.mxu0
      %v506 = vadd.f32 0.0, %v505
      %v507 = vpop.f32.mrf.mxu0
      %508 = vmatprep.mubr.bf16.mxu0 0
      %509 = vmatmul.mubr.bf16.gmra.mxu0 %v370
      %v510 = vpop.f32.mrf.mxu0
      %v511 = vadd.f32 0.0, %v510
      %v512 = vpop.f32.mrf.mxu0
      %v513 = vpop.f32.mrf.mxu0
      %v514 = vadd.f32 0.0, %v513
      %v515 = vpop.f32.mrf.mxu0
      %516 = vmatprep.mubr.bf16.mxu0 0
      %517 = vmatmul.mubr.bf16.gmra.mxu0 %v373
      %v518 = vpop.f32.mrf.mxu0
      %v519 = vadd.f32 0.0, %v518
      %v520 = vpop.f32.mrf.mxu0
      %v521 = vpop.f32.mrf.mxu0
      %v522 = vadd.f32 0.0, %v521
      %v523 = vpop.f32.mrf.mxu0
      %524 = vmatprep.mubr.bf16.mxu0 0
      %525 = vmatmul.mubr.bf16.gmra.mxu0 %v376
      %v526 = vpop.f32.mrf.mxu0
      %v527 = vadd.f32 0.0, %v526
      %v528 = vpop.f32.mrf.mxu0
      %v529 = vpop.f32.mrf.mxu0
      %v530 = vadd.f32 0.0, %v529
      %v531 = vpop.f32.mrf.mxu0
      %532 = vmatprep.mubr.bf16.mxu0 0
      %533 = vmatmul.mubr.bf16.gmra.mxu0 %v379
      %v534 = vpop.f32.mrf.mxu0
      %v535 = vadd.f32 0.0, %v534
      %v536 = vpop.f32.mrf.mxu0
      %v537 = vpop.f32.mrf.mxu0
      %v538 = vadd.f32 0.0, %v537
      %v539 = vpop.f32.mrf.mxu0
      %540 = vmatprep.mubr.bf16.mxu0 0
      %541 = vmatmul.mubr.bf16.gmra.mxu0 %v382
      %v542 = vpop.f32.mrf.mxu0
      %v543 = vadd.f32 0.0, %v542
      %v544 = vpop.f32.mrf.mxu0
      %v545 = vpop.f32.mrf.mxu0
      %v546 = vadd.f32 0.0, %v545
      %v547 = vpop.f32.mrf.mxu0
      %548 = vdwg.mxu0
      %v549 = vpack.c.bf16 %v426, %v423
      %v550 = vpack.c.bf16 %v434, %v431
      %v551 = vpack.c.bf16 %v442, %v439
      %v552 = vpack.c.bf16 %v450, %v447
      %v553 = vpack.c.bf16 %v458, %v455
      %v554 = vpack.c.bf16 %v466, %v463
      %v555 = vpack.c.bf16 %v474, %v471
      %v556 = vpack.c.bf16 %v482, %v479
      %v557 = vpack.c.bf16 %v490, %v487
      %v558 = vpack.c.bf16 %v498, %v495
      %v559 = vpack.c.bf16 %v506, %v503
      %v560 = vpack.c.bf16 %v514, %v511
      %v561 = vpack.c.bf16 %v522, %v519
      %v562 = vpack.c.bf16 %v530, %v527
      %v563 = vpack.c.bf16 %v538, %v535
      %v564 = vpack.c.bf16 %v546, %v543
      %v581 = vunpack.c.l.b16 %v549
      %v582 = vunpack.c.h.b16 %v549
      %v583 = vunpack.c.l.b16 %v550
      %v584 = vunpack.c.h.b16 %v550
      %v585 = vunpack.c.l.b16 %v551
      %v586 = vunpack.c.h.b16 %v551
      %v587 = vunpack.c.l.b16 %v552
      %v588 = vunpack.c.h.b16 %v552
      %v589 = vunpack.c.l.b16 %v553
      %v590 = vunpack.c.h.b16 %v553
      %v591 = vunpack.c.l.b16 %v554
      %v592 = vunpack.c.h.b16 %v554
      %v593 = vunpack.c.l.b16 %v555
      %v594 = vunpack.c.h.b16 %v555
      %v595 = vunpack.c.l.b16 %v556
      %v596 = vunpack.c.h.b16 %v556
      %v597 = vunpack.c.l.b16 %v557
      %v598 = vunpack.c.h.b16 %v557
      %v599 = vunpack.c.l.b16 %v558
      %v600 = vunpack.c.h.b16 %v558
      %v601 = vunpack.c.l.b16 %v559
      %v602 = vunpack.c.h.b16 %v559
      %v603 = vunpack.c.l.b16 %v560
      %v604 = vunpack.c.h.b16 %v560
      %v605 = vunpack.c.l.b16 %v561
      %v606 = vunpack.c.h.b16 %v561
      %v607 = vunpack.c.l.b16 %v562
      %v608 = vunpack.c.h.b16 %v562
      %v609 = vunpack.c.l.b16 %v563
      %v610 = vunpack.c.h.b16 %v563
      %v611 = vunpack.c.l.b16 %v564
      %v612 = vunpack.c.h.b16 %v564
      %v613 = vpack.c.b16 %v581, %v581
      %v614 = vpack.c.b16 %v582, %v582
      %v615 = vpack.c.b16 %v583, %v583
      %v616 = vpack.c.b16 %v584, %v584
      %v617 = vpack.c.b16 %v585, %v585
      %v618 = vpack.c.b16 %v586, %v586
      %v619 = vpack.c.b16 %v587, %v587
      %v620 = vpack.c.b16 %v588, %v588
      %v621 = vpack.c.b16 %v589, %v589
      %v622 = vpack.c.b16 %v590, %v590
      %v623 = vpack.c.b16 %v591, %v591
      %v624 = vpack.c.b16 %v592, %v592
      %v625 = vpack.c.b16 %v593, %v593
      %v626 = vpack.c.b16 %v594, %v594
      %v627 = vpack.c.b16 %v595, %v595
      %v628 = vpack.c.b16 %v596, %v596
      %v629 = vpack.c.b16 %v597, %v597
      %v630 = vpack.c.b16 %v598, %v598
      %v631 = vpack.c.b16 %v599, %v599
      %v632 = vpack.c.b16 %v600, %v600
      %v633 = vpack.c.b16 %v601, %v601
      %v634 = vpack.c.b16 %v602, %v602
      %v635 = vpack.c.b16 %v603, %v603
      %v636 = vpack.c.b16 %v604, %v604
      %v637 = vpack.c.b16 %v605, %v605
      %v638 = vpack.c.b16 %v606, %v606
      %v639 = vpack.c.b16 %v607, %v607
      %v640 = vpack.c.b16 %v608, %v608
      %v641 = vpack.c.b16 %v609, %v609
      %v642 = vpack.c.b16 %v610, %v610
      %v643 = vpack.c.b16 %v611, %v611
      %v644 = vpack.c.b16 %v612, %v612
      %677 = vst [vmem:[%s194] sm:$0xf] %v613
      %678 = vst [vmem:[%s194 + $0x4] sm:$0xf] %v614
      %679 = vst [vmem:[%s194 + $0x8] sm:$0xf] %v615
      %680 = vst [vmem:[%s194 + $0xc] sm:$0xf] %v616
      %681 = vst [vmem:[%s194 + $0x10] sm:$0xf] %v617
      %682 = vst [vmem:[%s194 + $0x14] sm:$0xf] %v618
      %683 = vst [vmem:[%s194 + $0x18] sm:$0xf] %v619
      %684 = vst [vmem:[%s194 + $0x1c] sm:$0xf] %v620
      %685 = vst [vmem:[%s194 + $0x20] sm:$0xf] %v621
      %686 = vst [vmem:[%s194 + $0x24] sm:$0xf] %v622
      %687 = vst [vmem:[%s194 + $0x28] sm:$0xf] %v623
      %688 = vst [vmem:[%s194 + $0x2c] sm:$0xf] %v624
      %689 = vst [vmem:[%s194 + $0x30] sm:$0xf] %v625
      %690 = vst [vmem:[%s194 + $0x34] sm:$0xf] %v626
      %691 = vst [vmem:[%s194 + $0x38] sm:$0xf] %v627
      %692 = vst [vmem:[%s194 + $0x3c] sm:$0xf] %v628
      %693 = vst [vmem:[%s194 + $0x40] sm:$0xf] %v629
      %694 = vst [vmem:[%s194 + $0x44] sm:$0xf] %v630
      %695 = vst [vmem:[%s194 + $0x48] sm:$0xf] %v631
      %696 = vst [vmem:[%s194 + $0x4c] sm:$0xf] %v632
      %697 = vst [vmem:[%s194 + $0x50] sm:$0xf] %v633
      %698 = vst [vmem:[%s194 + $0x54] sm:$0xf] %v634
      %699 = vst [vmem:[%s194 + $0x58] sm:$0xf] %v635
      %700 = vst [vmem:[%s194 + $0x5c] sm:$0xf] %v636
      %701 = vst [vmem:[%s194 + $0x60] sm:$0xf] %v637
      %702 = vst [vmem:[%s194 + $0x64] sm:$0xf] %v638
      %703 = vst [vmem:[%s194 + $0x68] sm:$0xf] %v639
      %704 = vst [vmem:[%s194 + $0x6c] sm:$0xf] %v640
      %705 = vst [vmem:[%s194 + $0x70] sm:$0xf] %v641
      %706 = vst [vmem:[%s194 + $0x74] sm:$0xf] %v642
      %707 = vst [vmem:[%s194 + $0x78] sm:$0xf] %v643
      %708 = vst [vmem:[%s194 + $0x7c] sm:$0xf] %v644
      %v709 = vld [vmem:[%s3] sm:$0x1]
      %v710 = vadd.f32 %v423, %v426
      %v711 = vadd.f32 %v710, %v431
      %v712 = vadd.f32 %v711, %v434
      %v713 = vadd.f32 %v712, %v439
      %v714 = vadd.f32 %v713, %v442
      %v715 = vadd.f32 %v714, %v447
      %v716 = vadd.f32 %v715, %v450
      %v717 = vadd.f32 %v716, %v455
      %v718 = vadd.f32 %v717, %v458
      %v719 = vadd.f32 %v718, %v463
      %v720 = vadd.f32 %v719, %v466
      %v721 = vadd.f32 %v720, %v471
      %v722 = vadd.f32 %v721, %v474
      %v723 = vadd.f32 %v722, %v479
      %v724 = vadd.f32 %v723, %v482
      %v725 = vadd.f32 %v724, %v487
      %v726 = vadd.f32 %v725, %v490
      %v727 = vadd.f32 %v726, %v495
      %v728 = vadd.f32 %v727, %v498
      %v729 = vadd.f32 %v728, %v503
      %v730 = vadd.f32 %v729, %v506
      %v731 = vadd.f32 %v730, %v511
      %v732 = vadd.f32 %v731, %v514
      %v733 = vadd.f32 %v732, %v519
      %v734 = vadd.f32 %v733, %v522
      %v735 = vadd.f32 %v734, %v527
      %v736 = vadd.f32 %v735, %v530
      %v737 = vadd.f32 %v736, %v535
      %v738 = vadd.f32 %v737, %v538
      %v739 = vadd.f32 %v738, %v543
      %v740 = vadd.f32 %v739, %v546
      %v741 = vrot.slane %v740, 4
      %v742 = vadd.f32 %v740, %v741
      %v743 = vrot.slane %v742, 2
      %v744 = vadd.f32 %v742, %v743
      %v745 = vrot.slane %v744, 1
      %v746 = vadd.f32 %v744, %v745
      %v747 = vadd.f32 %v709, %v746
      %748 = vst [vmem:[%s3] sm:$0x1] %v747
      %v749 = vld [vmem:[%s4] sm:$0x1]
      %v750 = vmul.f32 %v423, %v423
      %v751 = vmul.f32 %v426, %v426
      %v752 = vmul.f32 %v431, %v431
      %v753 = vmul.f32 %v434, %v434
      %v754 = vmul.f32 %v439, %v439
      %v755 = vmul.f32 %v442, %v442
      %v756 = vmul.f32 %v447, %v447
      %v757 = vmul.f32 %v450, %v450
      %v758 = vmul.f32 %v455, %v455
      %v759 = vmul.f32 %v458, %v458
      %v760 = vmul.f32 %v463, %v463
      %v761 = vmul.f32 %v466, %v466
      %v762 = vmul.f32 %v471, %v471
      %v763 = vmul.f32 %v474, %v474
      %v764 = vmul.f32 %v479, %v479
      %v765 = vmul.f32 %v482, %v482
      %v766 = vmul.f32 %v487, %v487
      %v767 = vmul.f32 %v490, %v490
      %v768 = vmul.f32 %v495, %v495
      %v769 = vmul.f32 %v498, %v498
      %v770 = vmul.f32 %v503, %v503
      %v771 = vmul.f32 %v506, %v506
      %v772 = vmul.f32 %v511, %v511
      %v773 = vmul.f32 %v514, %v514
      %v774 = vmul.f32 %v519, %v519
      %v775 = vmul.f32 %v522, %v522
      %v776 = vmul.f32 %v527, %v527
      %v777 = vmul.f32 %v530, %v530
      %v778 = vmul.f32 %v535, %v535
      %v779 = vmul.f32 %v538, %v538
      %v780 = vmul.f32 %v543, %v543
      %v781 = vmul.f32 %v546, %v546
      %v782 = vadd.f32 %v750, %v751
      %v783 = vadd.f32 %v782, %v752
      %v784 = vadd.f32 %v783, %v753
      %v785 = vadd.f32 %v784, %v754
      %v786 = vadd.f32 %v785, %v755
      %v787 = vadd.f32 %v786, %v756
      %v788 = vadd.f32 %v787, %v757
      %v789 = vadd.f32 %v788, %v758
      %v790 = vadd.f32 %v789, %v759
      %v791 = vadd.f32 %v790, %v760
      %v792 = vadd.f32 %v791, %v761
      %v793 = vadd.f32 %v792, %v762
      %v794 = vadd.f32 %v793, %v763
      %v795 = vadd.f32 %v794, %v764
      %v796 = vadd.f32 %v795, %v765
      %v797 = vadd.f32 %v796, %v766
      %v798 = vadd.f32 %v797, %v767
      %v799 = vadd.f32 %v798, %v768
      %v800 = vadd.f32 %v799, %v769
      %v801 = vadd.f32 %v800, %v770
      %v802 = vadd.f32 %v801, %v771
      %v803 = vadd.f32 %v802, %v772
      %v804 = vadd.f32 %v803, %v773
      %v805 = vadd.f32 %v804, %v774
      %v806 = vadd.f32 %v805, %v775
      %v807 = vadd.f32 %v806, %v776
      %v808 = vadd.f32 %v807, %v777
      %v809 = vadd.f32 %v808, %v778
      %v810 = vadd.f32 %v809, %v779
      %v811 = vadd.f32 %v810, %v780
      %v812 = vadd.f32 %v811, %v781
      %v813 = vrot.slane %v812, 4
      %v814 = vadd.f32 %v812, %v813
      %v815 = vrot.slane %v814, 2
      %v816 = vadd.f32 %v814, %v815
      %v817 = vrot.slane %v816, 1
      %v818 = vadd.f32 %v816, %v817
      %v819 = vadd.f32 %v749, %v818
      %820 = vst [vmem:[%s4] sm:$0x1] %v819
      %s821 = smul.u32 32, %s16
      %p822 = scmp.lt.s32.totalorder %s821, 63
      %s823 = scalar_select %p822, %s821, 63
      %s824 = smul.addr %s823, 4
      %s825 = scalar_lea.vmem %s2, %s824
      // Predicated region
      $region33: #{conv_block_forward.2} parent=27 // pred_check
        %p826 = pneg %p81
      $region34: #{conv_block_forward.2} parent=27 // pred_check_branch
        %828 = sbr.rel (%p826) target = $region36
      $region35: #{conv_block_forward.2} parent=27 // pred_region
        %s829 = smul.u32 32, %s16
      $region36: #{conv_block_forward.2} parent=27 // pred_fallthru
        _
      // Predicated region
      $region37: #{conv_block_forward.2} parent=27 // pred_check
        %p830 = pneg %p102
      $region38: #{conv_block_forward.2} parent=27 // pred_check_branch
        %832 = sbr.rel (%p830) target = $region40
      $region39: #{conv_block_forward.2} parent=27 // pred_region
        _
      $region40: #{conv_block_forward.2} parent=27 // pred_fallthru
        _
      // Predicated region
      $region41: #{conv_block_forward.2} parent=27 // pred_check
        %p833 = pneg %p123
      $region42: #{conv_block_forward.2} parent=27 // pred_check_branch
        %835 = sbr.rel (%p833) target = $region44
      $region43: #{conv_block_forward.2} parent=27 // pred_region
        _
      $region44: #{conv_block_forward.2} parent=27 // pred_fallthru
        _
      // Predicated region
      $region45: #{conv_block_forward.2} parent=27 // pred_check
        %p836 = pneg %p102
      $region46: #{conv_block_forward.2} parent=27 // pred_check_branch
        %838 = sbr.rel (%p836) target = $region48
      $region47: #{conv_block_forward.2} parent=27 // pred_region
        _
      $region48: #{conv_block_forward.2} parent=27 // pred_fallthru
        _
      // Predicated region
      $region49: #{conv_block_forward.2} parent=27 // pred_check
        %p839 = pneg %p123
      $region50: #{conv_block_forward.2} parent=27 // pred_check_branch
        %841 = sbr.rel (%p839) target = $region52
      $region51: #{conv_block_forward.2} parent=27 // pred_region
        _
      $region52: #{conv_block_forward.2} parent=27 // pred_fallthru
        _
    $region28: #{conv_block_forward.2} parent=5 // pred_fallthru
      _
    %p842 = scmp.le.s32.totalorder 2, %s11
    // Predicated region
    $region53: #{conv_block_forward.2} parent=5 // pred_check
      %p843 = pneg %p842
    $region54: #{conv_block_forward.2} parent=5 // pred_check_branch
      %845 = sbr.rel (%p843) target = $region56
    $region55: #{conv_block_forward.2} parent=5 // pred_region
      %s846 = ssub.s32 %s11, 2
      // Predicated region
      $region57: #{conv_block_forward.2} parent=55 // pred_check
        %p847 = pneg %p87
      $region58: #{conv_block_forward.2} parent=55 // pred_check_branch
        %849 = sbr.rel (%p847) target = $region60
      $region59: #{conv_block_forward.2} parent=55 // pred_region
        %s850 = smul.u32 32, %s17
        %p851 = scmp.lt.s32.totalorder %s850, 63
        %s852 = scalar_select %p851, %s850, 63
        %s853 = smul.addr %s852, 4
        %s854 = scalar_lea.vmem %s2, %s853
      $region60: #{conv_block_forward.2} parent=55 // pred_fallthru
        _
    $region56: #{conv_block_forward.2} parent=5 // pred_fallthru
      _
  $region6: #{conv_block_forward.2} parent=0 // loop_footer
    %s15 = sadd.s32 1, %s11
  $region7: #{conv_block_forward.2} parent=0 // loop_footer_branch
    %10 = sbr.rel target = $region3
  $region8: #{conv_block_forward.2} parent=0 // loop_exit
    _

</llo_original>
